<compile_context>
chip_gen: v6e
topology: v6e:2x2x1
jax: 0.10.0
libtpu: 0.0.40
codegen_flags: <defaults>
</compile_context>

<pallas_src>
import functools
import math

import jax
import jax.numpy as jnp
from jax.experimental import pallas as pl
from jax.experimental.pallas import tpu as pltpu

LANES = 128
ACC_MAX_ROWS = 64   # resident accumulator block (64,128) f32 = 32 KiB per shard


def _sublane_multiple(dtype) -> int:
    """Minimum second-to-last tile dim for this dtype (8/f32, 16/bf16, 32/i8)."""
    bits = jnp.dtype(dtype).itemsize * 8
    return max(8, (32 // bits) * 8)


def _chip_config():
    """Best-effort (tensorcores per chip, target input bytes per grid step)."""
    kind = ""
    try:
        kind = jax.devices()[0].device_kind.lower()
    except Exception:
        pass
    if "v7" in kind or "7x" in kind:
        # 2 TCs, ~3.2 TB/s HBM per TC, 32 MiB scoped-VMEM default:
        # 8 MiB per step (4 MiB per input block) -> 16 MiB double-buffered.
        return 2, 8 << 20
    if "v6" in kind:
        return 1, 8 << 20
    # v5e / unknown: 16 MiB scoped-VMEM default -> keep buffers at 8 MiB.
    return 1, 4 << 20


def _rnd_partial_kernel(pred_ref, targ_ref, out_ref, *, tile_rows, acc_rows,
                        total_rows, tiles_per_shard, needs_mask):
    """Accumulate sum((target - pred)^2) into one (acc_rows,128) block per shard."""
    shard = pl.program_id(0)   # (core-)parallel axis; size 1 on single-TC chips
    step = pl.program_id(1)    # reduction axis

    @pl.when(step == 0)
    def _():
        out_ref[...] = jnp.zeros_like(out_ref)

    diff = targ_ref[...].astype(jnp.float32) - pred_ref[...].astype(jnp.float32)
    sq = diff * diff

    folds = tile_rows // acc_rows

    def accumulate(vals):
        # (tile_rows,128) -> (folds, acc_rows, 128) fold: acc_rows/8 independent
        # vreg add chains (VALU ILP); no XLU / SMEM traffic in the hot loop.
        out_ref[...] += jnp.sum(vals.reshape(folds, acc_rows, LANES), axis=0)

    if needs_mask:
        # Only emitted (statically) for ragged coverage; at runtime only tail /
        # fully-clamped tiles take this branch and pay the mask.
        base_row = (shard * tiles_per_shard + step) * tile_rows
        is_tail = base_row + tile_rows > total_rows

        @pl.when(jnp.logical_not(is_tail))
        def _():
            accumulate(sq)

        @pl.when(is_tail)
        def _():
            row_ids = jax.lax.broadcasted_iota(jnp.int32, (tile_rows, LANES), 0)
            accumulate(jnp.where(row_ids + base_row < total_rows, sq, 0.0))
    else:
        accumulate(sq)


def rnd_state_predictor_loss(state_pred: jax.Array, state_target: jax.Array) -> jax.Array:
    """Pallas equivalent of RndStatePredictor.forward (returns a scalar f32)."""
    assert state_pred.shape == state_target.shape
    n_elems = state_pred.size

    sub = max(_sublane_multiple(state_pred.dtype),
              _sublane_multiple(state_target.dtype))
    group = sub * LANES

    pred_flat = jnp.ravel(state_pred)
    targ_flat = jnp.ravel(state_target)

    # --- ragged tail (< sub*128 elements): tiny plain-JAX sum, no jnp.pad ---
    main_n = (n_elems // group) * group
    tail_sum = None
    if main_n < n_elems:
        # TODO(synk): the prefix slice below may still materialize a copy in
        # eager mode; a fully copy-free ragged path would need manual DMA.
        d = (targ_flat[main_n:].astype(jnp.float32)
             - pred_flat[main_n:].astype(jnp.float32))
        tail_sum = jnp.sum(d * d)
        pred_flat = pred_flat[:main_n]
        targ_flat = targ_flat[:main_n]

    if main_n == 0:
        return tail_sum * (0.5 / n_elems)

    rows = main_n // LANES                       # multiple of `sub`
    pred2d = pred_flat.reshape(rows, LANES)      # lane-dense slab, no copy
    targ2d = targ_flat.reshape(rows, LANES)

    # --- chip- and dtype-aware tiling ---------------------------------------
    num_cores, target_step_bytes = _chip_config()
    itemsize_sum = (jnp.dtype(state_pred.dtype).itemsize
                    + jnp.dtype(state_target.dtype).itemsize)
    bytes_per_row = LANES * itemsize_sum
    tile_rows = max(ACC_MAX_ROWS,
                    (target_step_bytes // bytes_per_row) // ACC_MAX_ROWS * ACC_MAX_ROWS)
    tile_rows = min(tile_rows, rows)             # both multiples of `sub`
    acc_rows = math.gcd(tile_rows, ACC_MAX_ROWS)  # >= 8, divides tile_rows

    total_tiles = pl.cdiv(rows, tile_rows)
    num_shards = num_cores if total_tiles >= num_cores else 1
    tiles_per_shard = pl.cdiv(total_tiles, num_shards)
    covered_rows = num_shards * tiles_per_shard * tile_rows
    needs_mask = covered_rows > rows             # static Python bool
    last_tile = total_tiles - 1

    def in_index_map(s, i):
        t = s * tiles_per_shard + i
        if needs_mask:
            # Never request a block entirely past the array end; the in-kernel
            # mask (from the unclamped position) zeroes its contribution.
            t = jnp.minimum(t, last_tile)
        return (t, 0)

    kernel = functools.partial(
        _rnd_partial_kernel,
        tile_rows=tile_rows,
        acc_rows=acc_rows,
        total_rows=rows,
        tiles_per_shard=tiles_per_shard,
        needs_mask=needs_mask,
    )

    cost = pl.CostEstimate(
        flops=3 * n_elems,
        transcendentals=0,
        bytes_accessed=n_elems * itemsize_sum + num_shards * acc_rows * LANES * 4,
    )

    if num_shards > 1:
        # Real per-TensorCore split (v7x); fall back to plain "parallel" if
        # core-parallel lowering is unavailable on this toolchain.
        dims_candidates = [(pltpu.CORE_PARALLEL, pltpu.ARBITRARY),
                           (pltpu.PARALLEL, pltpu.ARBITRARY)]
    else:
        dims_candidates = [(pltpu.ARBITRARY, pltpu.ARBITRARY)]

    partials = None
    last_err = None
    for dims in dims_candidates:
        try:
            partials = pl.pallas_call(
                kernel,
                out_shape=jax.ShapeDtypeStruct((num_shards, acc_rows, LANES),
                                               jnp.float32),
                grid_spec=pltpu.PrefetchScalarGridSpec(
                    num_scalar_prefetch=0,
                    grid=(num_shards, tiles_per_shard),
                    in_specs=[
                        pl.BlockSpec((tile_rows, LANES), in_index_map),
                        pl.BlockSpec((tile_rows, LANES), in_index_map),
                    ],
                    out_specs=pl.BlockSpec((None, acc_rows, LANES),
                                           lambda s, i: (s, 0, 0)),
                ),
                compiler_params=pltpu.CompilerParams(dimension_semantics=dims),
                cost_estimate=cost,
            )(pred2d, targ2d)
            break
        except Exception as err:  # only reachable on the multi-core fallback path
            last_err = err
    if partials is None:
        raise last_err

    # Single cross-lane reduce + fused (0.5 / N) scale, once.
    total = jnp.sum(partials)
    if tail_sum is not None:
        total = total + tail_sum
    return total * (0.5 / n_elems)


if __name__ == "__main__":
    key = jax.random.PRNGKey(0)
    k_pred, k_targ = jax.random.split(key)

    # Small NCHW-like shape consistent with RND state features.
    shape = (2, 4, 16, 16)
    state_pred = jax.random.normal(k_pred, shape, dtype=jnp.float32)
    state_target = jax.random.normal(k_targ, shape, dtype=jnp.float32)

    loss = rnd_state_predictor_loss(state_pred, state_target)
    jax.block_until_ready(loss)

    ref = jnp.mean(0.5 * (state_target - state_pred) ** 2)
    assert jnp.allclose(loss, ref, rtol=1e-5, atol=1e-6), (loss, ref)

    # Ragged-size check (exercises the no-pad tail path).
    shape2 = (3, 5, 7, 11)
    p2 = jax.random.normal(k_pred, shape2, dtype=jnp.float32)
    t2 = jax.random.normal(k_targ, shape2, dtype=jnp.float32)
    loss2 = rnd_state_predictor_loss(p2, t2)
    jax.block_until_ready(loss2)
    ref2 = jnp.mean(0.5 * (t2 - p2) ** 2)
    assert jnp.allclose(loss2, ref2, rtol=1e-5, atol=1e-6), (loss2, ref2)

    print("KERNEL_OK")
</pallas_src>

<mosaic_0001>
module attributes {stable_mosaic.version = 11 : i64} {
  func.func @_rnd_partial_kernel(%arg0: i32, %arg1: i32, %arg2: memref<16x128xf32, #tpu.memory_space<vmem>>, %arg3: memref<16x128xf32, #tpu.memory_space<vmem>>, %arg4: memref<1x16x128xf32, #tpu.memory_space<vmem>>) attributes {dimension_semantics = [#tpu.dimension_semantics<arbitrary>, #tpu.dimension_semantics<arbitrary>], iteration_bounds = array<i64: 1, 1>, scalar_prefetch = 0 : i64, scratch_operands = 0 : i64, tpu.core_type = #tpu.core_type<tc>, window_params = [{transform_indices = @transform_0, window_bounds = array<i64: 16, 128>}, {transform_indices = @transform_1, window_bounds = array<i64: 16, 128>}, {transform_indices = @transform_2, window_bounds = array<i64: 1, 16, 128>}]} {
    %c0_i32 = arith.constant 0 : i32
    %0 = arith.cmpi eq, %arg1, %c0_i32 : i32
    %1 = arith.extui %0 : i1 to i32
    %c0_i32_0 = arith.constant 0 : i32
    %2 = arith.cmpi ne, %1, %c0_i32_0 : i32
    scf.if %2 {
      %cst_10 = arith.constant 0.000000e+00 : f32
      %15 = vector.broadcast %cst_10 : f32 to vector<16x128xf32>
      %c0_11 = arith.constant 0 : index
      %c0_12 = arith.constant 0 : index
      %c0_13 = arith.constant 0 : index
      %16 = vector.load %arg4[%c0_11, %c0_12, %c0_13] : memref<1x16x128xf32, #tpu.memory_space<vmem>>, vector<1x16x128xf32>
      %17 = vector.shape_cast %16 : vector<1x16x128xf32> to vector<16x128xf32>
      %18 = vector.shape_cast %15 : vector<16x128xf32> to vector<1x16x128xf32>
      tpu.vector_store %arg4[%c0_11, %c0_12, %c0_13], %18 {strides = array<i32>} : memref<1x16x128xf32, #tpu.memory_space<vmem>>, vector<1x16x128xf32>,
    } else {
    }
    %c0 = arith.constant 0 : index
    %c0_1 = arith.constant 0 : index
    %3 = vector.load %arg3[%c0, %c0_1] : memref<16x128xf32, #tpu.memory_space<vmem>>, vector<16x128xf32>
    %c0_2 = arith.constant 0 : index
    %c0_3 = arith.constant 0 : index
    %4 = vector.load %arg2[%c0_2, %c0_3] : memref<16x128xf32, #tpu.memory_space<vmem>>, vector<16x128xf32>
    %5 = arith.subf %3, %4 : vector<16x128xf32>
    %6 = arith.mulf %5, %5 : vector<16x128xf32>
    %c0_4 = arith.constant 0 : index
    %c0_5 = arith.constant 0 : index
    %c0_6 = arith.constant 0 : index
    %7 = vector.load %arg4[%c0_4, %c0_5, %c0_6] : memref<1x16x128xf32, #tpu.memory_space<vmem>>, vector<1x16x128xf32>
    %8 = vector.shape_cast %7 : vector<1x16x128xf32> to vector<16x128xf32>
    %9 = vector.shape_cast %6 : vector<16x128xf32> to vector<1x16x128xf32>
    %cst = arith.constant dense<0.000000e+00> : vector<16x128xf32>
    %10 = vector.multi_reduction <add>, %9, %cst [0] : vector<1x16x128xf32> to vector<16x128xf32>
    %11 = arith.addf %8, %10 : vector<16x128xf32>
    %c0_7 = arith.constant 0 : index
    %c0_8 = arith.constant 0 : index
    %c0_9 = arith.constant 0 : index
    %12 = vector.load %arg4[%c0_7, %c0_8, %c0_9] : memref<1x16x128xf32, #tpu.memory_space<vmem>>, vector<1x16x128xf32>
    %13 = vector.shape_cast %12 : vector<1x16x128xf32> to vector<16x128xf32>
    %14 = vector.shape_cast %11 : vector<16x128xf32> to vector<1x16x128xf32>
    tpu.vector_store %arg4[%c0_7, %c0_8, %c0_9], %14 {strides = array<i32>} : memref<1x16x128xf32, #tpu.memory_space<vmem>>, vector<1x16x128xf32>,
    return
  }
  func.func @transform_0(%arg0: i32, %arg1: i32) -> (i32, i32) {
    %c1_i32 = arith.constant 1 : i32
    %0 = arith.muli %arg0, %c1_i32 : i32
    %1 = arith.addi %0, %arg1 : i32
    %c0_i32 = arith.constant 0 : i32
    %c0_i32_0 = arith.constant 0 : i32
    return %1, %c0_i32 : i32, i32
  }
  func.func @transform_1(%arg0: i32, %arg1: i32) -> (i32, i32) {
    %c1_i32 = arith.constant 1 : i32
    %0 = arith.muli %arg0, %c1_i32 : i32
    %1 = arith.addi %0, %arg1 : i32
    %c0_i32 = arith.constant 0 : i32
    %c0_i32_0 = arith.constant 0 : i32
    return %1, %c0_i32 : i32, i32
  }
  func.func @transform_2(%arg0: i32, %arg1: i32) -> (i32, i32, i32) {
    %c0_i32 = arith.constant 0 : i32
    %c0_i32_0 = arith.constant 0 : i32
    %c0_i32_1 = arith.constant 0 : i32
    return %arg0, %c0_i32, %c0_i32_0 : i32, i32, i32
  }
}

</mosaic_0001>

<llo_original>
// kernel: tpu_custom_call.1
$region0: #{tpu_custom_call.1}
  #allocation0 [shape = 'u32[]', space=smem, size = 0x4, offset = 0x4, fixed_abs, tag = 'smem constant byte address 0x4 - core index']
  #allocation1 [shape = 'u32[144,128]{1,0:T(1,128)}', space=vmem, size = 0x12000, scoped, tag = 'internal scratch']
  %s0 = inlined_call_operand.hbm [shape: f32[16,128], index: 0, kind: input, shape index: {}]
  %s1 = inlined_call_operand.hbm [shape: f32[16,128], index: 1, kind: input, shape index: {}]
  %s2 = inlined_call_operand.hbm [shape: f32[1,16,128], index: 2, kind: output, shape index: {}]
  %s3 = sld [smem:[#allocation0]]
  $region30: #{tpu_custom_call.1} parent=0
    _
  %s5 = ssub.s32 1, %s3
  %s6 = scalar_select 0, %s5, %s3
  $region1: #{tpu_custom_call.1} parent=0
    #allocation2 [shape = 'u8[8192]{0}', space=vmem, size = 0x2000, scoped, tag = 'input window, operand 0, single buffered']
    #allocation3 [shape = 's32[1]{0}', space=sflag, size = 0x4, scoped, tag = 'scoped memory for tpu_custom_call.1']
    #allocation4 [shape = 's32[1]{0}', space=sflag, size = 0x4, scoped, tag = 'scoped memory for tpu_custom_call.1']
    #allocation5 [shape = 'u8[8192]{0}', space=vmem, size = 0x2000, scoped, tag = 'input window, operand 1, single buffered']
    #allocation6 [shape = 's32[1]{0}', space=sflag, size = 0x4, scoped, tag = 'scoped memory for tpu_custom_call.1']
    #allocation7 [shape = 'u8[8192]{0}', space=vmem, size = 0x2000, scoped, tag = 'output window, operand 0, single buffered']
    %7 = vsyncpa [#allocation3], 0
    %8 = vsyncpa [#allocation6], 0
    %9 = vsyncpa [#allocation4], 0
    // Predicated region
    $region2: #{tpu_custom_call.1} parent=1 // pred_check
      _
    $region3: #{tpu_custom_call.1} parent=1 // pred_check_branch
      %11 = sbr.rel (0) target = $region5
    $region4: #{tpu_custom_call.1} parent=1 // pred_region
      %s12 = sadd.s32 0, 0
      %s13 = smul.u32 2, %s12
      %s15 = ssub.s32 256, 256
      %16 = vsyncadd [#allocation3], %s15
      %s17 = smul.addr %s13, 128
      %s18 = scalar_lea.hbm %s0, %s17
      %s19 = sshll.u32 [#allocation2], 4
      %s20 = int_to_ptr.vmem [resolvable:$true] %s19
      %25 = dma.hbm_to_vmem [thread:$0]  %s18, 256, %s20, [#allocation3], 128, 128, 8
    $region5: #{tpu_custom_call.1} parent=1 // pred_fallthru
      _
    // Predicated region
    $region6: #{tpu_custom_call.1} parent=1 // pred_check
      _
    $region7: #{tpu_custom_call.1} parent=1 // pred_check_branch
      %27 = sbr.rel (0) target = $region9
    $region8: #{tpu_custom_call.1} parent=1 // pred_region
      %s28 = sadd.s32 0, 0
      %s29 = smul.u32 2, %s28
      %s31 = ssub.s32 256, 256
      %32 = vsyncadd [#allocation6], %s31
      %s33 = smul.addr %s29, 128
      %s34 = scalar_lea.hbm %s1, %s33
      %s35 = sshll.u32 [#allocation5], 4
      %s36 = int_to_ptr.vmem [resolvable:$true] %s35
      %41 = dma.hbm_to_vmem [thread:$0]  %s34, 256, %s36, [#allocation6], 128, 128, 8
    $region9: #{tpu_custom_call.1} parent=1 // pred_fallthru
      _
    // Predicated region
    $region10: #{tpu_custom_call.1} parent=1 // pred_check
      _
    $region11: #{tpu_custom_call.1} parent=1 // pred_check_branch
      %43 = sbr.rel (0) target = $region13
    $region12: #{tpu_custom_call.1} parent=1 // pred_region
      %44 = dma.done [#allocation3], 256
    $region13: #{tpu_custom_call.1} parent=1 // pred_fallthru
      _
    // Predicated region
    $region14: #{tpu_custom_call.1} parent=1 // pred_check
      _
    $region15: #{tpu_custom_call.1} parent=1 // pred_check_branch
      %46 = sbr.rel (0) target = $region17
    $region16: #{tpu_custom_call.1} parent=1 // pred_region
      %47 = dma.done [#allocation6], 256
    $region17: #{tpu_custom_call.1} parent=1 // pred_fallthru
      _
    %s48 = sadd.s32 0, 0
    %s49 = smul.u32 2, %s48
    %s50 = sadd.s32 0, 0
    %s51 = smul.u32 2, %s50
    %p52 = scmp.eq.s32.totalorder 0, 0
    // Predicated region
    $region18: #{tpu_custom_call.1} parent=1 // pred_check
      %p53 = pneg %p52
    $region19: #{tpu_custom_call.1} parent=1 // pred_check_branch
      %55 = sbr.rel (%p53) target = $region21
    $region20: #{tpu_custom_call.1} parent=1 // pred_region
      %56 = vst [vmem:[#allocation7] sm:$0xff] 0.0
      %57 = vst [vmem:[#allocation7 + $0x8] sm:$0xff] 0.0
    $region21: #{tpu_custom_call.1} parent=1 // pred_fallthru
      _
    %v58 = vld [vmem:[#allocation5] sm:$0xff]
    %v59 = vld [vmem:[#allocation5 + $0x8] sm:$0xff]
    %v60 = vld [vmem:[#allocation2] sm:$0xff]
    %v61 = vld [vmem:[#allocation2 + $0x8] sm:$0xff]
    %v62 = vsub.f32 %v58, %v60
    %v63 = vsub.f32 %v59, %v61
    %v64 = vmul.f32 %v62, %v62
    %v65 = vmul.f32 %v63, %v63
    %v66 = vld [vmem:[#allocation7] sm:$0xff]
    %v67 = vld [vmem:[#allocation7 + $0x8] sm:$0xff]
    %v68 = vadd.f32 %v64, 0.0
    %v69 = vadd.f32 %v65, 0.0
    %v70 = vadd.f32 %v66, %v68
    %v71 = vadd.f32 %v67, %v69
    %72 = vst [vmem:[#allocation7] sm:$0xff] %v70
    %73 = vst [vmem:[#allocation7 + $0x8] sm:$0xff] %v71
    // Predicated region
    $region22: #{tpu_custom_call.1} parent=1 // pred_check
      _
    $region23: #{tpu_custom_call.1} parent=1 // pred_check_branch
      %75 = sbr.rel (0) target = $region25
    $region24: #{tpu_custom_call.1} parent=1 // pred_region
      %s77 = ssub.s32 256, 256
      %78 = vsyncadd [#allocation4], %s77
      %s79 = sshll.u32 [#allocation7], 4
      %s80 = int_to_ptr.vmem [resolvable:$true] %s79
      %85 = dma.vmem_to_hbm [thread:$0]  %s80, 256, %s2, [#allocation4], 128, 128, 8
    $region25: #{tpu_custom_call.1} parent=1 // pred_fallthru
      _
    // Predicated region
    $region26: #{tpu_custom_call.1} parent=1 // pred_check
      _
    $region27: #{tpu_custom_call.1} parent=1 // pred_check_branch
      %87 = sbr.rel (0) target = $region29
    $region28: #{tpu_custom_call.1} parent=1 // pred_region
      %88 = dma.done [#allocation4], 256
    $region29: #{tpu_custom_call.1} parent=1 // pred_fallthru
      _
    %89 = vsyncpa [#allocation3], 1
    %90 = vsyncpa [#allocation6], 1
    %91 = vsyncpa [#allocation4], 1

</llo_original>
